<compile_context>
chip_gen: v5e
topology: v5e:2x2
jax: 0.10.0
libtpu: 0.0.40
codegen_flags: <defaults>
</compile_context>

<pallas_src>
import functools

import jax
import jax.numpy as jnp
from jax.experimental import pallas as pl
from jax.experimental.pallas import tpu as pltpu


# ---------------------------------------------------------------------------
# Kernels
# ---------------------------------------------------------------------------
def _residual_kernel(x_ref, w_ref, b_ref, o_ref, *, use_mxu):
    """Fused  (W @ x + b) + x  on a (C, TS) channels-on-sublanes tile."""
    x = x_ref[0]                                    # (C, TS)
    xf = x.astype(jnp.float32)
    if use_mxu:
        # C >= 16: MXU contraction with f32 accumulation (memory-bound even at
        # partial MXU fill, so this is at the HBM roofline).
        y = jnp.dot(w_ref[...], x, preferred_element_type=jnp.float32)
    else:
        # C < 16 only: short static unroll of broadcast FMAs on the VPU.
        w = w_ref[...].astype(jnp.float32)          # (C, C)
        C = x.shape[0]
        y = jnp.zeros_like(xf)
        for ci in range(C):
            y = y + w[:, ci:ci + 1] * xf[ci:ci + 1, :]
    o_ref[0] = (y + b_ref[...] + xf).astype(o_ref.dtype)


def _residual_tiny_c_kernel(x_ref, w_ref, b_ref, o_ref):
    """Tiny-C path: x tile (1, C, TR, 128); w (C,C) and b (C,) live in SMEM.

    Sublane/lane dims of every tile are spatial and fully dense, so no
    channel-padding is moved over HBM.  Channel mix = C^2 scalar-broadcast FMAs
    on the VPU (C < 8 for f32, C < 16 for bf16 -> memory-bound).
    """
    C = x_ref.shape[1]
    for co in range(C):
        acc = x_ref[0, co].astype(jnp.float32) + b_ref[co]      # residual+bias
        for ci in range(C):
            acc = acc + w_ref[co, ci] * x_ref[0, ci].astype(jnp.float32)
        o_ref[0, co] = acc.astype(o_ref.dtype)


# ---------------------------------------------------------------------------
# Tiling helpers
# ---------------------------------------------------------------------------
def _round_up(x, m):
    return (x + m - 1) // m * m


def _choose_spatial_tile(S, C, itemsize, batch):
    """Largest lane-dense spatial tile under ~4 MiB/block; shrunk (>=256 lanes)
    until the grid has >= 4 programs so v7x's two TensorCores both get work."""
    budget = 4 * 1024 * 1024
    padded_c = _round_up(C, max(1, 32 // itemsize))          # sublane packing
    max_ts = max(128, (budget // (padded_c * itemsize)) // 128 * 128)
    if S <= 128:
        return S                                             # full extent
    if S % 128 == 0:
        tile_s = min(max_ts, S)
    else:
        tile_s = min(max_ts, (S // 128) * 128)               # ragged tail OK
    min_tile = min(tile_s, 256)
    while batch * pl.cdiv(S, tile_s) < 4 and tile_s > min_tile:
        tile_s = max(min_tile, ((tile_s // 2) // 128) * 128)
    return tile_s


def _choose_row_tile(R, C, itemsize, batch):
    """Row tile (multiple of 8) for the tiny-C (1, C, tr, 128) layout."""
    budget = 4 * 1024 * 1024
    max_tr = max(8, (budget // (C * 128 * itemsize)) // 8 * 8)
    tr = min(max_tr, R)
    min_tr = min(tr, 32)
    while batch * pl.cdiv(R, tr) < 4 and tr > min_tr:
        tr = max(min_tr, ((tr // 2) // 8) * 8)
    return tr


# ---------------------------------------------------------------------------
# Wrapper
# ---------------------------------------------------------------------------
def residual_pointwise_conv(x_nchw, weight, bias, *, donate_x=False):
    """out = Conv2d(C, C, kernel_size=1)(x) + x   (NCHW in / NCHW out).

    weight: [C_out, C_in, 1, 1]  (PyTorch Conv2d layout), C_out == C_in.
    bias:   [C_out]
    donate_x: alias the output onto x's buffer (pass True only if the caller
              can donate x).
    """
    B, C, H, W = x_nchw.shape
    assert weight.shape[:2] == (C, C) and weight.shape[2:] == (1, 1)
    dtype = x_nchw.dtype
    itemsize = jnp.dtype(dtype).itemsize
    S = H * W

    w_mat = weight[:, :, 0, 0]                      # (C_out, C_in)
    b_vec = bias.astype(jnp.float32)
    io_alias = {0: 0} if donate_x else {}

    # ---- tiny-C path: spatial sublanes, weights/bias as SMEM scalars -------
    tiny_c = (C * itemsize < 32) and (S % 128 == 0) and ((S // 128) % 8 == 0)
    if tiny_c:
        R = S // 128
        x_in = x_nchw.reshape(B, C, R, 128)         # may relayout; see header
        tr = _choose_row_tile(R, C, itemsize, B)
        grid = (B, pl.cdiv(R, tr))
        x_block = C * tr * 128 * itemsize
        vmem_need = 4 * x_block + (2 << 20)         # 2 streams x 2 buffers
        out = pl.pallas_call(
            _residual_tiny_c_kernel,
            out_shape=jax.ShapeDtypeStruct((B, C, R, 128), dtype),
            grid_spec=pltpu.PrefetchScalarGridSpec(
                num_scalar_prefetch=0,
                grid=grid,
                in_specs=[
                    pl.BlockSpec((1, C, tr, 128), lambda b, r: (b, 0, r, 0)),
                    pl.BlockSpec(memory_space=pltpu.MemorySpace.SMEM),  # w
                    pl.BlockSpec(memory_space=pltpu.MemorySpace.SMEM),  # b
                ],
                out_specs=pl.BlockSpec((1, C, tr, 128),
                                       lambda b, r: (b, 0, r, 0)),
            ),
            compiler_params=pltpu.CompilerParams(
                dimension_semantics=("parallel", "parallel"),
                vmem_limit_bytes=int(max(32 << 20, vmem_need))),
            input_output_aliases=io_alias,
        )(x_in, w_mat.astype(jnp.float32), b_vec)
        return out.reshape(B, C, H, W)

    # ---- general path: channels on sublanes, spatial on lanes --------------
    x_flat = x_nchw.reshape(B, C, S)                # may relayout; see header
    use_mxu = C >= 16
    w_in = w_mat.astype(dtype if use_mxu else jnp.float32)
    tile_s = _choose_spatial_tile(S, C, itemsize, B)
    grid = (B, pl.cdiv(S, tile_s))

    padded_c = _round_up(C, max(1, 32 // itemsize))
    x_block = padded_c * tile_s * itemsize
    w_bytes = _round_up(C, 8) * _round_up(C, 128) * jnp.dtype(w_in.dtype).itemsize
    vmem_need = 4 * x_block + 2 * w_bytes + (2 << 20)

    kernel = functools.partial(_residual_kernel, use_mxu=use_mxu)
    out = pl.pallas_call(
        kernel,
        out_shape=jax.ShapeDtypeStruct((B, C, S), dtype),
        grid_spec=pltpu.PrefetchScalarGridSpec(
            num_scalar_prefetch=0,
            grid=grid,
            in_specs=[
                pl.BlockSpec((1, C, tile_s), lambda b, s: (b, 0, s)),  # x tile
                pl.BlockSpec((C, C), lambda b, s: (0, 0)),             # weight
                pl.BlockSpec((C, 1), lambda b, s: (0, 0)),             # bias
            ],
            out_specs=pl.BlockSpec((1, C, tile_s), lambda b, s: (b, 0, s)),
        ),
        compiler_params=pltpu.CompilerParams(
            dimension_semantics=("parallel", "parallel"),
            vmem_limit_bytes=int(max(32 << 20, vmem_need))),
        input_output_aliases=io_alias,
    )(x_flat, w_in, b_vec.reshape(C, 1))
    return out.reshape(B, C, H, W)


# ---------------------------------------------------------------------------
# Self-test
# ---------------------------------------------------------------------------
if __name__ == "__main__":
    root = jax.random.PRNGKey(0)

    def run_case(B, C, H, W, dtype):
        kx, kw, kb = jax.random.split(
            jax.random.fold_in(root, B * 100000 + C * 1000 + H * 10 + W), 3)
        x = jax.random.normal(kx, (B, C, H, W), dtype=jnp.float32).astype(dtype)
        weight = jax.random.normal(kw, (C, C, 1, 1), dtype=jnp.float32) * 0.1
        bias = jax.random.normal(kb, (C,), dtype=jnp.float32) * 0.1

        out = jax.block_until_ready(residual_pointwise_conv(x, weight, bias))

        # Pure-JAX reference of Residual(fn).forward(x) = fn(x) + x
        x32 = x.astype(jnp.float32)
        fn_x = jnp.einsum("oc,bchw->bohw", weight[:, :, 0, 0], x32,
                          precision=jax.lax.Precision.HIGHEST)
        ref = fn_x + bias[None, :, None, None] + x32

        assert out.shape == x.shape and out.dtype == x.dtype
        tol = 1e-4 if dtype == jnp.float32 else 3e-2
        err = float(jnp.max(jnp.abs(out.astype(jnp.float32) - ref)))
        assert err <= tol, ((B, C, H, W, str(dtype)), err)

    run_case(2, 4, 16, 16, jnp.float32)    # general path, small-C VPU branch
    run_case(1, 4, 32, 32, jnp.float32)    # tiny-C sublane-dense path
    run_case(2, 32, 16, 16, jnp.float32)   # general path, MXU branch
    run_case(2, 16, 12, 20, jnp.float32)   # ragged spatial tail (Pallas-masked)
    run_case(2, 8, 16, 16, jnp.bfloat16)   # bf16, VPU branch

    print("KERNEL_OK")
</pallas_src>

<mosaic_0001>
module attributes {stable_mosaic.version = 11 : i64} {
  func.func @_residual_kernel(%arg0: i32, %arg1: i32, %arg2: memref<1x4x256xf32, #tpu.memory_space<vmem>>, %arg3: memref<4x4xf32, #tpu.memory_space<vmem>>, %arg4: memref<4x1xf32, #tpu.memory_space<vmem>>, %arg5: memref<1x4x256xf32, #tpu.memory_space<vmem>>) attributes {dimension_semantics = [#tpu.dimension_semantics<parallel>, #tpu.dimension_semantics<parallel>], iteration_bounds = array<i64: 2, 1>, scalar_prefetch = 0 : i64, scratch_operands = 0 : i64, tpu.core_type = #tpu.core_type<tc>, window_params = [{transform_indices = @transform_0, window_bounds = array<i64: 1, 4, 256>}, {pipeline_mode = #tpu.pipeline_mode<synchronous>, transform_indices = @transform_1, window_bounds = array<i64: 4, 4>}, {pipeline_mode = #tpu.pipeline_mode<synchronous>, transform_indices = @transform_2, window_bounds = array<i64: 4, 1>}, {transform_indices = @transform_3, window_bounds = array<i64: 1, 4, 256>}]} {
    %c0 = arith.constant 0 : index
    %c0_0 = arith.constant 0 : index
    %c0_1 = arith.constant 0 : index
    %0 = vector.load %arg2[%c0, %c0_0, %c0_1] : memref<1x4x256xf32, #tpu.memory_space<vmem>>, vector<1x4x256xf32>
    %1 = vector.shape_cast %0 : vector<1x4x256xf32> to vector<4x256xf32>
    %c0_2 = arith.constant 0 : index
    %c0_3 = arith.constant 0 : index
    %2 = vector.load %arg3[%c0_2, %c0_3] : memref<4x4xf32, #tpu.memory_space<vmem>>, vector<4x4xf32>
    %cst = arith.constant 0.000000e+00 : f32
    %3 = vector.broadcast %cst : f32 to vector<4x256xf32>
    %4 = vector.extract_strided_slice %2 {offsets = [0, 0], sizes = [4, 1], strides = [1, 1]} : vector<4x4xf32> to vector<4x1xf32>
    %5 = vector.extract_strided_slice %1 {offsets = [0, 0], sizes = [1, 256], strides = [1, 1]} : vector<4x256xf32> to vector<1x256xf32>
    %6 = vector.broadcast %4 : vector<4x1xf32> to vector<4x256xf32>
    %7 = vector.broadcast %5 : vector<1x256xf32> to vector<4x256xf32>
    %8 = arith.mulf %6, %7 : vector<4x256xf32>
    %9 = arith.addf %3, %8 : vector<4x256xf32>
    %10 = vector.extract_strided_slice %2 {offsets = [0, 1], sizes = [4, 1], strides = [1, 1]} : vector<4x4xf32> to vector<4x1xf32>
    %11 = vector.extract_strided_slice %1 {offsets = [1, 0], sizes = [1, 256], strides = [1, 1]} : vector<4x256xf32> to vector<1x256xf32>
    %12 = vector.broadcast %10 : vector<4x1xf32> to vector<4x256xf32>
    %13 = vector.broadcast %11 : vector<1x256xf32> to vector<4x256xf32>
    %14 = arith.mulf %12, %13 : vector<4x256xf32>
    %15 = arith.addf %9, %14 : vector<4x256xf32>
    %16 = vector.extract_strided_slice %2 {offsets = [0, 2], sizes = [4, 1], strides = [1, 1]} : vector<4x4xf32> to vector<4x1xf32>
    %17 = vector.extract_strided_slice %1 {offsets = [2, 0], sizes = [1, 256], strides = [1, 1]} : vector<4x256xf32> to vector<1x256xf32>
    %18 = vector.broadcast %16 : vector<4x1xf32> to vector<4x256xf32>
    %19 = vector.broadcast %17 : vector<1x256xf32> to vector<4x256xf32>
    %20 = arith.mulf %18, %19 : vector<4x256xf32>
    %21 = arith.addf %15, %20 : vector<4x256xf32>
    %22 = vector.extract_strided_slice %2 {offsets = [0, 3], sizes = [4, 1], strides = [1, 1]} : vector<4x4xf32> to vector<4x1xf32>
    %23 = vector.extract_strided_slice %1 {offsets = [3, 0], sizes = [1, 256], strides = [1, 1]} : vector<4x256xf32> to vector<1x256xf32>
    %24 = vector.broadcast %22 : vector<4x1xf32> to vector<4x256xf32>
    %25 = vector.broadcast %23 : vector<1x256xf32> to vector<4x256xf32>
    %26 = arith.mulf %24, %25 : vector<4x256xf32>
    %27 = arith.addf %21, %26 : vector<4x256xf32>
    %c0_4 = arith.constant 0 : index
    %c0_5 = arith.constant 0 : index
    %28 = vector.load %arg4[%c0_4, %c0_5] : memref<4x1xf32, #tpu.memory_space<vmem>>, vector<4x1xf32>
    %29 = vector.broadcast %28 : vector<4x1xf32> to vector<4x256xf32>
    %30 = arith.addf %27, %29 : vector<4x256xf32>
    %31 = arith.addf %30, %1 : vector<4x256xf32>
    %c0_6 = arith.constant 0 : index
    %c0_7 = arith.constant 0 : index
    %c0_8 = arith.constant 0 : index
    %32 = vector.load %arg5[%c0_6, %c0_7, %c0_8] : memref<1x4x256xf32, #tpu.memory_space<vmem>>, vector<1x4x256xf32>
    %33 = vector.shape_cast %32 : vector<1x4x256xf32> to vector<4x256xf32>
    %34 = vector.shape_cast %31 : vector<4x256xf32> to vector<1x4x256xf32>
    tpu.vector_store %arg5[%c0_6, %c0_7, %c0_8], %34 {strides = array<i32>} : memref<1x4x256xf32, #tpu.memory_space<vmem>>, vector<1x4x256xf32>,
    return
  }
  func.func @transform_0(%arg0: i32, %arg1: i32) -> (i32, i32, i32) {
    %c0_i32 = arith.constant 0 : i32
    %c0_i32_0 = arith.constant 0 : i32
    return %arg0, %c0_i32, %arg1 : i32, i32, i32
  }
  func.func @transform_1(%arg0: i32, %arg1: i32) -> (i32, i32) {
    %c0_i32 = arith.constant 0 : i32
    %c0_i32_0 = arith.constant 0 : i32
    %c0_i32_1 = arith.constant 0 : i32
    return %c0_i32, %c0_i32_0 : i32, i32
  }
  func.func @transform_2(%arg0: i32, %arg1: i32) -> (i32, i32) {
    %c0_i32 = arith.constant 0 : i32
    %c0_i32_0 = arith.constant 0 : i32
    %c0_i32_1 = arith.constant 0 : i32
    return %c0_i32, %c0_i32_0 : i32, i32
  }
  func.func @transform_3(%arg0: i32, %arg1: i32) -> (i32, i32, i32) {
    %c0_i32 = arith.constant 0 : i32
    %c0_i32_0 = arith.constant 0 : i32
    return %arg0, %c0_i32, %arg1 : i32, i32, i32
  }
}

</mosaic_0001>

<llo_original>
// kernel: tpu_custom_call.1
$region0: #{tpu_custom_call.1}
  #allocation0 [shape = 'u32[]', space=smem, size = 0x4, offset = 0x4, fixed_abs, tag = 'smem constant byte address 0x4 - core index']
  #allocation1 [shape = 'u32[72,128]{1,0:T(1,128)}', space=vmem, size = 0x9000, scoped, tag = 'internal scratch']
  %s0 = inlined_call_operand.hbm [shape: f32[2,4,256], index: 0, kind: input, shape index: {}]
  %s1 = inlined_call_operand.vmem [shape: f32[4,4], index: 1, kind: input, shape index: {}]
  %s2 = inlined_call_operand.vmem [shape: f32[4,1], index: 2, kind: input, shape index: {}]
  %s3 = inlined_call_operand.hbm [shape: f32[2,4,256], index: 3, kind: output, shape index: {}]
  %s4 = sld [smem:[#allocation0]]
  $region49: #{tpu_custom_call.1} parent=0
    _
  %s6 = ssub.s32 1, %s4
  %s7 = scalar_select 0, %s6, %s4
  $region1: #{tpu_custom_call.1} parent=0
    #allocation2 [shape = 'u8[8192]{0}', space=vmem, size = 0x2000, scoped, tag = 'input window, operand 0']
    #allocation3 [shape = 's32[2]{0}', space=sflag, size = 0x8, scoped, tag = 'scoped memory for tpu_custom_call.1']
    #allocation4 [shape = 's32[2]{0}', space=sflag, size = 0x8, scoped, tag = 'scoped memory for tpu_custom_call.1']
    #allocation5 [shape = 'u8[8192]{0}', space=vmem, size = 0x2000, scoped, tag = 'output window, operand 0']
    %8 = vsyncpa [#allocation3], 0
    %s9 = scalar_lea.sflag [#allocation3], 1
    %10 = vsyncpa %s9, 0
    %11 = vsyncpa [#allocation4], 0
    %s12 = scalar_lea.sflag [#allocation4], 1
    %13 = vsyncpa %s12, 0
    loop: start=0, step=1, limit=4
    $region2: #{tpu_custom_call.1} parent=1 // loop_pre_header
      _
    $region3: #{tpu_custom_call.1} parent=1 // loop_header
      %s15 = sphi 0, %s19
      %p16 = scmp.ge.s32.totalorder %s15, 4
      %s22 = sphi 0, %s34
      %s23 = sphi 0, %s30
      %s24 = sphi 0, %s22
      %s25 = sphi 0, %s23
      %s26 = sphi 0, %s24
      %s27 = sphi 0, %s25
      %s39 = sphi 0, %s41
      %s42 = sphi 0, %s39
      %s43 = sphi 0, %s42
      %s59 = sphi 0, %s43
      %s63 = sphi 0, %s63
      %s65 = sphi 0, %s63
      %s66 = sphi 0, %s65
      %s80 = sphi 0, %s66
      %s84 = sphi 0, %s84
      %s86 = sphi 0, %s84
      %s87 = sphi 0, %s86
      %s101 = sphi 0, %s87
      %s109 = sphi 0, %s111
      %s112 = sphi 0, %s109
      %s113 = sphi 0, %s112
      %s129 = sphi 0, %s113
    $region4: #{tpu_custom_call.1} parent=1 // loop_header_branch
      %18 = sbr.rel (%p16) target = $region8
    $region5: #{tpu_custom_call.1} parent=1 // loop_body
      %s20 = ssub.s32 %s15, 1
      %s21 = ssub.s32 %s15, 2
      %s28 = sadd.s32 1, %s23
      %p29 = scmp.ge.s32.totalorder %s28, 1
      %s30 = scalar_select %p29, 0, %s28
      %s31 = sadd.s32 1, %s22
      %s32 = scalar_select %p29, %s31, %s22
      %p33 = scmp.ge.s32.totalorder %s32, 2
      %s34 = scalar_select %p33, 0, %s32
      %s35 = ssub.s32 %s22, %s34
      %s36 = ssub.s32 %s23, %s30
      %s37 = sor.u32 %s35, %s36
      %p38 = scmp.eq.s32.totalorder %s37, 0
      %s40 = sadd.s32 %s39, 1
      %s41 = scalar_select %p38, %s39, %s40
      %p44 = pneg %p38
      %p45 = scmp.eq.s32.totalorder %s15, 1
      %p46 = por %p44, %p45
      %p47 = scmp.ne.s32.totalorder %s39, %s42
      %p48 = scmp.eq.s32.totalorder %s15, 0
      %p49 = por %p47, %p48
      %p50 = scmp.ne.s32.totalorder %s39, %s42
      %p51 = scmp.eq.s32.totalorder %s20, 1
      %p52 = por %p50, %p51
      %p53 = scmp.ne.s32.totalorder %s42, %s43
      %p54 = scmp.eq.s32.totalorder %s20, 0
      %p55 = por %p53, %p54
      %p56 = scmp.ne.s32.totalorder %s42, %s43
      %p57 = scmp.eq.s32.totalorder %s21, 1
      %p58 = por %p56, %p57
      %p60 = scmp.ne.s32.totalorder %s43, %s59
      %p61 = scmp.eq.s32.totalorder %s21, 0
      %p62 = por %p60, %p61
      %s64 = sadd.s32 %s63, 1
      %p67 = scmp.eq.s32.totalorder %s15, 1
      %p68 = scmp.ne.s32.totalorder %s63, %s65
      %p69 = scmp.eq.s32.totalorder %s15, 0
      %p70 = por %p68, %p69
      %p71 = scmp.ne.s32.totalorder %s63, %s65
      %p72 = scmp.eq.s32.totalorder %s20, 1
      %p73 = por %p71, %p72
      %p74 = scmp.ne.s32.totalorder %s65, %s66
      %p75 = scmp.eq.s32.totalorder %s20, 0
      %p76 = por %p74, %p75
      %p77 = scmp.ne.s32.totalorder %s65, %s66
      %p78 = scmp.eq.s32.totalorder %s21, 1
      %p79 = por %p77, %p78
      %p81 = scmp.ne.s32.totalorder %s66, %s80
      %p82 = scmp.eq.s32.totalorder %s21, 0
      %p83 = por %p81, %p82
      %s85 = sadd.s32 %s84, 1
      %p88 = scmp.eq.s32.totalorder %s15, 1
      %p89 = scmp.ne.s32.totalorder %s84, %s86
      %p90 = scmp.eq.s32.totalorder %s15, 0
      %p91 = por %p89, %p90
      %p92 = scmp.ne.s32.totalorder %s84, %s86
      %p93 = scmp.eq.s32.totalorder %s20, 1
      %p94 = por %p92, %p93
      %p95 = scmp.ne.s32.totalorder %s86, %s87
      %p96 = scmp.eq.s32.totalorder %s20, 0
      %p97 = por %p95, %p96
      %p98 = scmp.ne.s32.totalorder %s86, %s87
      %p99 = scmp.eq.s32.totalorder %s21, 1
      %p100 = por %p98, %p99
      %p102 = scmp.ne.s32.totalorder %s87, %s101
      %p103 = scmp.eq.s32.totalorder %s21, 0
      %p104 = por %p102, %p103
      %s105 = ssub.s32 %s22, %s34
      %s106 = ssub.s32 %s23, %s30
      %s107 = sor.u32 %s105, %s106
      %p108 = scmp.eq.s32.totalorder %s107, 0
      %s110 = sadd.s32 %s109, 1
      %s111 = scalar_select %p108, %s109, %s110
      %p114 = pneg %p108
      %p115 = scmp.eq.s32.totalorder %s15, 1
      %p116 = por %p114, %p115
      %p117 = scmp.ne.s32.totalorder %s109, %s112
      %p118 = scmp.eq.s32.totalorder %s15, 0
      %p119 = por %p117, %p118
      %p120 = scmp.ne.s32.totalorder %s109, %s112
      %p121 = scmp.eq.s32.totalorder %s20, 1
      %p122 = por %p120, %p121
      %p123 = scmp.ne.s32.totalorder %s112, %s113
      %p124 = scmp.eq.s32.totalorder %s20, 0
      %p125 = por %p123, %p124
      %p126 = scmp.ne.s32.totalorder %s112, %s113
      %p127 = scmp.eq.s32.totalorder %s21, 1
      %p128 = por %p126, %p127
      %p130 = scmp.ne.s32.totalorder %s113, %s129
      %p131 = scmp.eq.s32.totalorder %s21, 0
      %p132 = por %p130, %p131
      %p133 = scmp.le.s32.totalorder 1, %s15
      %p134 = scmp.lt.s32.totalorder %s15, 3
      %p135 = pnand %p133, %p134
      %p136 = pneg %p135
      // Predicated region
      $region9: #{tpu_custom_call.1} parent=5 // pred_check
        _
      $region10: #{tpu_custom_call.1} parent=5 // pred_check_branch
        %138 = sbr.rel (%p135) target = $region12
      $region11: #{tpu_custom_call.1} parent=5 // pred_region
        %s139 = ssub.s32 %s15, 1
        // Predicated region
        $region13: #{tpu_custom_call.1} parent=11 // pred_check
          %p140 = pneg %p76
        $region14: #{tpu_custom_call.1} parent=11 // pred_check_branch
          %142 = sbr.rel (%p140) target = $region16
        $region15: #{tpu_custom_call.1} parent=11 // pred_region
          _
        $region16: #{tpu_custom_call.1} parent=11 // pred_fallthru
          _
        // Predicated region
        $region17: #{tpu_custom_call.1} parent=11 // pred_check
          %p143 = pneg %p97
        $region18: #{tpu_custom_call.1} parent=11 // pred_check_branch
          %145 = sbr.rel (%p143) target = $region20
        $region19: #{tpu_custom_call.1} parent=11 // pred_region
          _
        $region20: #{tpu_custom_call.1} parent=11 // pred_fallthru
          _
      $region12: #{tpu_custom_call.1} parent=5 // pred_fallthru
        _
      %p146 = scmp.lt.s32.totalorder %s15, 2
      // Predicated region
      $region21: #{tpu_custom_call.1} parent=5 // pred_check
        %p147 = pneg %p146
      $region22: #{tpu_custom_call.1} parent=5 // pred_check_branch
        %149 = sbr.rel (%p147) target = $region24
      $region23: #{tpu_custom_call.1} parent=5 // pred_region
        // Predicated region
        $region25: #{tpu_custom_call.1} parent=23 // pred_check
          %p150 = pneg %p49
        $region26: #{tpu_custom_call.1} parent=23 // pred_check_branch
          %152 = sbr.rel (%p150) target = $region28
        $region27: #{tpu_custom_call.1} parent=23 // pred_region
          %s153 = sand.u32 %s39, 1
          %s154 = scalar_lea.sflag [#allocation3], %s153
          %s155 = sand.u32 %s39, 1
          %s156 = smul.addr %s155, 8
          %s157 = scalar_lea.vmem [#allocation2], %s156
          %s158 = smul.u32 2, %s23
          %160 = vsyncadd %s154, 0
          %s161 = smul.addr %s22, 2
          %s162 = sadd.s32 %s158, %s161
          %s163 = smul.addr %s162, 4
          %s164 = scalar_lea.hbm %s0, %s163
          %s166 = sshll.u32 %s164, 4
          %s167 = int_to_ptr.hbm [resolvable:$true] %s166
          %s168 = sshll.u32 %s157, 4
          %s169 = int_to_ptr.vmem [resolvable:$true] %s168
          %171 = dma.hbm_to_vmem [thread:$0]  %s167, 128, %s169, %s154
        $region28: #{tpu_custom_call.1} parent=23 // pred_fallthru
          _
      $region24: #{tpu_custom_call.1} parent=5 // pred_fallthru
        _
      %p172 = scmp.le.s32.totalorder 1, %s15
      %p173 = scmp.lt.s32.totalorder %s15, 3
      %p174 = pnand %p172, %p173
      %p175 = pneg %p174
      // Predicated region
      $region29: #{tpu_custom_call.1} parent=5 // pred_check
        _
      $region30: #{tpu_custom_call.1} parent=5 // pred_check_branch
        %177 = sbr.rel (%p174) target = $region32
      $region31: #{tpu_custom_call.1} parent=5 // pred_region
        %s178 = ssub.s32 %s15, 1
        %s179 = sand.u32 %s42, 1
        %s180 = scalar_lea.sflag [#allocation3], %s179
        %s181 = sand.u32 %s42, 1
        %s182 = smul.addr %s181, 8
        %s183 = scalar_lea.vmem [#allocation2], %s182
        // Predicated region
        $region33: #{tpu_custom_call.1} parent=31 // pred_check
          %p184 = pneg %p55
        $region34: #{tpu_custom_call.1} parent=31 // pred_check_branch
          %186 = sbr.rel (%p184) target = $region36
        $region35: #{tpu_custom_call.1} parent=31 // pred_region
          %188 = dma.done %s180, 128
        $region36: #{tpu_custom_call.1} parent=31 // pred_fallthru
          _
        %s189 = sand.u32 %s42, 1
        %s190 = scalar_lea.sflag [#allocation3], %s189
        %s191 = sand.u32 %s42, 1
        %s192 = smul.addr %s191, 8
        %s193 = scalar_lea.vmem [#allocation2], %s192
        %p194 = pneg %p55
        %p195 = pneg %p52
        %p196 = pneg %p76
        %p197 = pneg %p73
        %p198 = pneg %p97
        %p199 = pneg %p94
        %p200 = pneg %p125
        %p201 = pneg %p122
        %s202 = sand.u32 %s112, 1
        %s203 = scalar_lea.sflag [#allocation4], %s202
        %s204 = sand.u32 %s112, 1
        %s205 = smul.addr %s204, 8
        %s206 = scalar_lea.vmem [#allocation5], %s205
        %s207 = smul.u32 2, %s25
        %s208 = smul.u32 2, %s25
        %v209 = vld [vmem:[%s183] sm:$0xff]
        %v210 = vld [vmem:[%s1] sm:$0xf]
        %212 = vset.pattern.permute.xlu0 0
        %213 = vperm.xlu0 %212, %v210
        %v214 = vpop.permute.xlu0 %213
        %v217 = vperm.slane %v209, 0
        %v218 = vperm.slane %v209, 4
        %v221 = vperm.slane %v217, 0
        %v222 = vperm.slane %v218, 0
        %v223 = vmul.f32 %v214, %v221
        %v224 = vmul.f32 %v214, %v222
        %v225 = vadd.f32 %v223, 0.0
        %v226 = vadd.f32 %v224, 0.0
        %227 = vset.pattern.permute.xlu0 1
        %228 = vperm.xlu0 %227, %v210
        %v229 = vpop.permute.xlu0 %228
        %v231 = vperm.slane %v209, 1
        %v232 = vperm.slane %v209, 5
        %v235 = vperm.slane %v231, 1
        %v236 = vperm.slane %v232, 1
        %v237 = vmul.f32 %v229, %v235
        %v238 = vmul.f32 %v229, %v236
        %v239 = vadd.f32 %v225, %v237
        %v240 = vadd.f32 %v226, %v238
        %241 = vset.pattern.permute.xlu0 2
        %242 = vperm.xlu0 %241, %v210
        %v243 = vpop.permute.xlu0 %242
        %v245 = vperm.slane %v209, 2
        %v246 = vperm.slane %v209, 6
        %v249 = vperm.slane %v245, 2
        %v250 = vperm.slane %v246, 2
        %v251 = vmul.f32 %v243, %v249
        %v252 = vmul.f32 %v243, %v250
        %v253 = vadd.f32 %v239, %v251
        %v254 = vadd.f32 %v240, %v252
        %255 = vset.pattern.permute.xlu0 3
        %256 = vperm.xlu0 %255, %v210
        %v257 = vpop.permute.xlu0 %256
        %v259 = vperm.slane %v209, 3
        %v260 = vperm.slane %v209, 7
        %v263 = vperm.slane %v259, 3
        %v264 = vperm.slane %v260, 3
        %v265 = vmul.f32 %v257, %v263
        %v266 = vmul.f32 %v257, %v264
        %v267 = vadd.f32 %v253, %v265
        %v268 = vadd.f32 %v254, %v266
        %v269 = vld [vmem:[%s2] sm:$0xf]
        %271 = vset.pattern.permute.xlu0 0
        %272 = vperm.xlu0 %271, %v269
        %v273 = vpop.permute.xlu0 %272
        %v275 = vadd.f32 %v267, %v273
        %v276 = vadd.f32 %v268, %v273
        %277 = vst [vmem:[#allocation1] ss:$2 sm:$0xff] %v209
        %v278 = vld.sshfl [vmem:[#allocation1] sm:$0xff pattern:$0x75316420]
        %v279 = vld.sshfl [vmem:[#allocation1 + $0x8] sm:$0xff pattern:$0x75316420]
        %v282 = vadd.f32 %v275, %v278
        %v283 = vadd.f32 %v276, %v279
        %v286 = vrot.slane %v283, 4
        %vm287 = vcmask 1043456
        %v288 = vsel %vm287, %v282, %v286
        %290 = vst [vmem:[%s206] sm:$0xff] %v288
        %s291 = sand.u32 %s112, 1
        %s292 = scalar_lea.sflag [#allocation4], %s291
        %s293 = sand.u32 %s112, 1
        %s294 = smul.addr %s293, 8
        %s295 = scalar_lea.vmem [#allocation5], %s294
        // Predicated region
        $region37: #{tpu_custom_call.1} parent=31 // pred_check
          %p296 = pneg %p122
        $region38: #{tpu_custom_call.1} parent=31 // pred_check_branch
          %298 = sbr.rel (%p296) target = $region40
        $region39: #{tpu_custom_call.1} parent=31 // pred_region
          %s299 = smul.u32 2, %s25
          %301 = vsyncadd %s292, 0
          %s302 = smul.addr %s24, 2
          %s303 = sadd.s32 %s299, %s302
          %s304 = smul.addr %s303, 4
          %s305 = scalar_lea.hbm %s3, %s304
          %s307 = sshll.u32 %s295, 4
          %s308 = int_to_ptr.vmem [resolvable:$true] %s307
          %s309 = sshll.u32 %s305, 4
          %s310 = int_to_ptr.hbm [resolvable:$true] %s309
          %312 = dma.vmem_to_hbm [thread:$0]  %s308, 128, %s310, %s292
        $region40: #{tpu_custom_call.1} parent=31 // pred_fallthru
          _
      $region32: #{tpu_custom_call.1} parent=5 // pred_fallthru
        _
      %p313 = scmp.le.s32.totalorder 2, %s15
      // Predicated region
      $region41: #{tpu_custom_call.1} parent=5 // pred_check
        %p314 = pneg %p313
      $region42: #{tpu_custom_call.1} parent=5 // pred_check_branch
        %316 = sbr.rel (%p314) target = $region44
      $region43: #{tpu_custom_call.1} parent=5 // pred_region
        %s317 = ssub.s32 %s15, 2
        // Predicated region
        $region45: #{tpu_custom_call.1} parent=43 // pred_check
          %p318 = pneg %p128
        $region46: #{tpu_custom_call.1} parent=43 // pred_check_branch
          %320 = sbr.rel (%p318) target = $region48
        $region47: #{tpu_custom_call.1} parent=43 // pred_region
          %s321 = sand.u32 %s113, 1
          %s322 = scalar_lea.sflag [#allocation4], %s321
          %s323 = sand.u32 %s113, 1
          %s324 = smul.addr %s323, 8
          %s325 = scalar_lea.vmem [#allocation5], %s324
          %327 = dma.done %s322, 128
        $region48: #{tpu_custom_call.1} parent=43 // pred_fallthru
          _
      $region44: #{tpu_custom_call.1} parent=5 // pred_fallthru
        _
    $region6: #{tpu_custom_call.1} parent=1 // loop_footer
      %s19 = sadd.s32 1, %s15
    $region7: #{tpu_custom_call.1} parent=1 // loop_footer_branch
      %14 = sbr.rel target = $region3
    $region8: #{tpu_custom_call.1} parent=1 // loop_exit
      _
    %328 = vsyncpa [#allocation3], 1
    %s329 = scalar_lea.sflag [#allocation3], 1
    %330 = vsyncpa %s329, 1
    %331 = vsyncpa [#allocation4], 1
    %s332 = scalar_lea.sflag [#allocation4], 1
    %333 = vsyncpa %s332, 1

</llo_original>
